<compile_context>
chip_gen: v5e
topology: v5e:2x2
jax: 0.10.0
libtpu: 0.0.40
codegen_flags: <defaults>
</compile_context>

<pallas_src>
import functools
import math

import jax
import jax.numpy as jnp
from jax.experimental import pallas as pl
from jax.experimental.pallas import tpu as pltpu


def _round_up(a: int, b: int) -> int:
    return (a + b - 1) // b * b


def _cdiv(a: int, b: int) -> int:
    return -(-a // b)


def _balanced_tile(dim: int, cap: int, align: int) -> int:
    """Smallest `align`-multiple tile that covers `dim` in the fewest blocks <= cap."""
    dim_a = _round_up(max(dim, 1), align)
    cap_a = max(align, cap // align * align)
    n_blocks = _cdiv(dim_a, cap_a)
    return _round_up(_cdiv(dim_a, n_blocks), align)


def _vmem_limit_bytes() -> int:
    """Generation-aware scoped-VMEM request (<= half of physical, <= 64 MiB)."""
    try:
        cap = pltpu.get_tpu_info().vmem_capacity_bytes
    except Exception:
        cap = 128 << 20  # v5e/v6e physical
    return int(min(64 << 20, cap // 2))


def _block_spec(block_shape, index_map, buffer_count=None):
    """BlockSpec, optionally with deeper multi-buffering (fallback if unsupported)."""
    if buffer_count is not None and hasattr(pl, "Buffered"):
        try:
            return pl.BlockSpec(block_shape, index_map,
                                pipeline_mode=pl.Buffered(buffer_count))
        except TypeError:
            pass
    return pl.BlockSpec(block_shape, index_map)


def _equal_linear_kernel(x_ref, w_ref, b_ref, o_ref, acc_ref, *, scale):
    """One (tm, tn) output tile; K is the innermost ("arbitrary") grid axis."""
    k = pl.program_id(2)

    @pl.when(k == 0)
    def _init():
        acc_ref[...] = jnp.zeros_like(acc_ref)

    # Plain (tm, tk) @ (tk, tn) MXU dot — weight was pre-transposed at prep time,
    # so no in-kernel transpose can steal vector-extended slots from MXU pushes.
    acc_ref[...] += jnp.dot(
        x_ref[...], w_ref[...], preferred_element_type=jnp.float32
    )

    @pl.when(k == pl.num_programs(2) - 1)
    def _finalize():
        # Equalized-LR scale + bias on the f32 accumulator (epilogue-only VPU
        # work), then a single cast to the output dtype.
        o_ref[...] = (acc_ref[...] * scale + b_ref[...]).astype(o_ref.dtype)


def prepare_equal_linear_params(weight_orig, bias, *,
                                compute_dtype=jnp.bfloat16,
                                tn_max: int = 512, tk_max: int = 1024):
    """One-time parameter prep: cast, transpose and pad the weight/bias.

    `compute_dtype` is an explicit knob: bf16 halves weight HBM traffic and runs
    the MXU at full rate (StyleGAN-accuracy-safe); pass jnp.float32 for exact
    f32 matmul semantics.
    """
    out_dim, in_dim = weight_orig.shape
    assert bias.shape == (out_dim,)

    tn = _balanced_tile(out_dim, tn_max, 128)
    tk = _balanced_tile(in_dim, tk_max, 128)
    n_pad = _round_up(out_dim, tn)
    k_pad = _round_up(in_dim, tk)

    # Pre-transpose once to (in_dim, out_dim); zero-pad to tile multiples
    # (padded K contributes nothing; padded N is sliced off after the kernel).
    w_t = weight_orig.T.astype(compute_dtype)
    if (k_pad, n_pad) != (in_dim, out_dim):
        w_t = jnp.pad(w_t, ((0, k_pad - in_dim), (0, n_pad - out_dim)))

    b2d = bias.astype(jnp.float32).reshape(1, out_dim)
    if n_pad != out_dim:
        b2d = jnp.pad(b2d, ((0, 0), (0, n_pad - out_dim)))

    return {
        "w_t": w_t,                      # (k_pad, n_pad), compute_dtype
        "bias": b2d,                     # (1, n_pad), f32
        "scale": math.sqrt(2.0 / in_dim),  # equalized-LR scale, logical fan_in
        "in_dim": in_dim,
        "out_dim": out_dim,
        "tn": tn,
        "tk": tk,
        "compute_dtype": compute_dtype,
    }


def equal_linear_apply(params, x, *, tm_max: int = 256):
    """Apply EqualLinear: x (B, in_dim) -> (B, out_dim)."""
    B, in_dim = x.shape
    assert in_dim == params["in_dim"]
    out_dim = params["out_dim"]
    compute_dtype = params["compute_dtype"]
    out_dtype = x.dtype

    k_pad, n_pad = params["w_t"].shape
    tn, tk = params["tn"], params["tk"]

    # bf16 packs 16 rows per vreg sublane group -> prefer 16-aligned M tiles.
    is_bf16 = jnp.dtype(compute_dtype) == jnp.dtype(jnp.bfloat16)
    m_align = 16 if (is_bf16 and B >= 16) else 8
    tm = _balanced_tile(B, tm_max, m_align)
    m_pad = _round_up(B, tm)
    grid_m = m_pad // tm

    # v7x has 2 TensorCores sharded over the parallel grid axes: make sure the
    # (M, N) grid has at least 2 blocks when possible (split N, which always
    # stays a 128-multiple divisor of the already-padded n_pad).
    if grid_m * (n_pad // tn) == 1 and n_pad >= 256:
        lanes = n_pad // 128
        tn = n_pad // 2 if lanes % 2 == 0 else 128
    grid_n = n_pad // tn
    grid_k = k_pad // tk

    # Per-call x prep (x is small in the weight-bound regime).
    xb = x.astype(compute_dtype)
    if (m_pad, k_pad) != (B, in_dim):
        xb = jnp.pad(xb, ((0, m_pad - B), (0, k_pad - in_dim)))

    # Small-batch / GEMV-like regime: deepen the weight-stream pipeline so the
    # (tk x tn) weight DMA latency is hidden behind the tiny per-step MXU work.
    w_buffers = 3 if (m_pad <= 128 and grid_n * grid_k >= 3) else None
    w_spec = _block_spec((tk, tn), lambda i, j, k: (k, j), w_buffers)

    grid = (grid_m, grid_n, grid_k)
    kernel = functools.partial(_equal_linear_kernel, scale=params["scale"])

    out_padded = pl.pallas_call(
        kernel,
        out_shape=jax.ShapeDtypeStruct((m_pad, n_pad), out_dtype),
        grid_spec=pltpu.PrefetchScalarGridSpec(
            num_scalar_prefetch=0,
            grid=grid,
            in_specs=[
                pl.BlockSpec((tm, tk), lambda i, j, k: (i, k)),   # x tile
                w_spec,                                           # W^T tile (in, out)
                pl.BlockSpec((1, tn), lambda i, j, k: (0, j)),    # bias tile
            ],
            out_specs=pl.BlockSpec((tm, tn), lambda i, j, k: (i, j)),
            scratch_shapes=[pltpu.VMEM((tm, tn), jnp.float32)],
        ),
        compiler_params=pltpu.CompilerParams(
            dimension_semantics=("parallel", "parallel", "arbitrary"),
            vmem_limit_bytes=_vmem_limit_bytes(),
        ),
    )(xb, params["w_t"], params["bias"])

    if (m_pad, n_pad) != (B, out_dim):
        out_padded = out_padded[:B, :out_dim]
    return out_padded


if __name__ == "__main__":
    key = jax.random.PRNGKey(0)

    def run_case(B, in_dim, out_dim, subkey, *, check_f32=False):
        kx, kw = jax.random.split(subkey)
        x = jax.random.normal(kx, (B, in_dim), dtype=jnp.float32)
        # Deterministic "parameter init": weight_orig ~ N(0,1), bias = 0.
        weight_orig = jax.random.normal(kw, (out_dim, in_dim), dtype=jnp.float32)
        bias = jnp.zeros((out_dim,), dtype=jnp.float32)

        params = prepare_equal_linear_params(weight_orig, bias)
        out = jax.block_until_ready(equal_linear_apply(params, x))
        assert out.shape == (B, out_dim)

        scale = math.sqrt(2.0 / in_dim)
        # Reference at the same operand precision (bf16 operands, f32 math).
        xr = x.astype(jnp.bfloat16).astype(jnp.float32)
        wr = weight_orig.astype(jnp.bfloat16).astype(jnp.float32)
        ref_bf16 = xr @ wr.T * scale + bias
        assert jnp.allclose(out, ref_bf16, atol=2e-2, rtol=2e-2), (B, in_dim, out_dim)

        if check_f32:
            # Loose check against exact f32 PyTorch math (bf16 cast error bound).
            ref_f32 = x @ (weight_orig * scale).T + bias
            assert jnp.allclose(out, ref_f32, atol=1e-1, rtol=1e-1), (B, in_dim, out_dim)

    k1, k2, k3 = jax.random.split(key, 3)
    # Small shape matching the module's typical use (exercises the tiny single-tile path).
    run_case(8, 32, 64, k1, check_f32=True)
    # Small-batch / larger-layer shape: exercises multi-block N/K grid and the
    # deeper (Buffered(3)) weight pipeline.
    run_case(8, 2048, 1024, k2)
    # Non-power-of-two batch: exercises balanced M tiling and output slicing.
    run_case(300, 512, 384, k3)

    print("KERNEL_OK")
</pallas_src>

<mosaic_0001>
module attributes {stable_mosaic.version = 11 : i64} {
  func.func @_equal_linear_kernel(%arg0: i32, %arg1: i32, %arg2: i32, %arg3: memref<8x128xbf16, #tpu.memory_space<vmem>>, %arg4: memref<128x128xbf16, #tpu.memory_space<vmem>>, %arg5: memref<1x128xf32, #tpu.memory_space<vmem>>, %arg6: memref<8x128xf32, #tpu.memory_space<vmem>>, %arg7: memref<8x128xf32, #tpu.memory_space<vmem>>) attributes {dimension_semantics = [#tpu.dimension_semantics<parallel>, #tpu.dimension_semantics<parallel>, #tpu.dimension_semantics<arbitrary>], iteration_bounds = array<i64: 1, 1, 1>, scalar_prefetch = 0 : i64, scratch_operands = 1 : i64, tpu.core_type = #tpu.core_type<tc>, window_params = [{transform_indices = @transform_0, window_bounds = array<i64: 8, 128>}, {transform_indices = @transform_1, window_bounds = array<i64: 128, 128>}, {transform_indices = @transform_2, window_bounds = array<i64: 1, 128>}, {transform_indices = @transform_3, window_bounds = array<i64: 8, 128>}]} {
    %c0_i32 = arith.constant 0 : i32
    %0 = arith.cmpi eq, %arg2, %c0_i32 : i32
    %1 = arith.extui %0 : i1 to i32
    %c0_i32_0 = arith.constant 0 : i32
    %2 = arith.cmpi ne, %1, %c0_i32_0 : i32
    scf.if %2 {
      %cst_10 = arith.constant 0.000000e+00 : f32
      %12 = vector.broadcast %cst_10 : f32 to vector<8x128xf32>
      %c0_11 = arith.constant 0 : index
      %c0_12 = arith.constant 0 : index
      %13 = vector.load %arg7[%c0_11, %c0_12] : memref<8x128xf32, #tpu.memory_space<vmem>>, vector<8x128xf32>
      tpu.vector_store %arg7[%c0_11, %c0_12], %12 {strides = array<i32>} : memref<8x128xf32, #tpu.memory_space<vmem>>, vector<8x128xf32>,
    } else {
    }
    %c0 = arith.constant 0 : index
    %c0_1 = arith.constant 0 : index
    %3 = vector.load %arg7[%c0, %c0_1] : memref<8x128xf32, #tpu.memory_space<vmem>>, vector<8x128xf32>
    %c0_2 = arith.constant 0 : index
    %c0_3 = arith.constant 0 : index
    %4 = vector.load %arg3[%c0_2, %c0_3] : memref<8x128xbf16, #tpu.memory_space<vmem>>, vector<8x128xbf16>
    %c0_4 = arith.constant 0 : index
    %c0_5 = arith.constant 0 : index
    %5 = vector.load %arg4[%c0_4, %c0_5] : memref<128x128xbf16, #tpu.memory_space<vmem>>, vector<128x128xbf16>
    %cst = arith.constant dense<0.000000e+00> : vector<8x128xf32>
    %6 = tpu.matmul %4, %5, %cst {dimension_numbers = #tpu.dot_dimension_numbers<[1], [0], [0], [1], [0, 0, 1, 1], [], []>} : vector<8x128xbf16>, vector<128x128xbf16>, vector<8x128xf32> -> vector<8x128xf32>
    %7 = arith.addf %3, %6 : vector<8x128xf32>
    %c0_6 = arith.constant 0 : index
    %c0_7 = arith.constant 0 : index
    %8 = vector.load %arg7[%c0_6, %c0_7] : memref<8x128xf32, #tpu.memory_space<vmem>>, vector<8x128xf32>
    tpu.vector_store %arg7[%c0_6, %c0_7], %7 {strides = array<i32>} : memref<8x128xf32, #tpu.memory_space<vmem>>, vector<8x128xf32>,
    %c0_i32_8 = arith.constant 0 : i32
    %9 = arith.cmpi eq, %arg2, %c0_i32_8 : i32
    %10 = arith.extui %9 : i1 to i32
    %c0_i32_9 = arith.constant 0 : i32
    %11 = arith.cmpi ne, %10, %c0_i32_9 : i32
    scf.if %11 {
      %c0_10 = arith.constant 0 : index
      %c0_11 = arith.constant 0 : index
      %12 = vector.load %arg7[%c0_10, %c0_11] : memref<8x128xf32, #tpu.memory_space<vmem>>, vector<8x128xf32>
      %cst_12 = arith.constant 2.500000e-01 : f32
      %13 = vector.broadcast %cst_12 : f32 to vector<8x128xf32>
      %14 = arith.mulf %12, %13 : vector<8x128xf32>
      %c0_13 = arith.constant 0 : index
      %c0_14 = arith.constant 0 : index
      %15 = vector.load %arg5[%c0_13, %c0_14] : memref<1x128xf32, #tpu.memory_space<vmem>>, vector<1x128xf32>
      %16 = vector.broadcast %15 : vector<1x128xf32> to vector<8x128xf32>
      %17 = arith.addf %14, %16 : vector<8x128xf32>
      %c0_15 = arith.constant 0 : index
      %c0_16 = arith.constant 0 : index
      %18 = vector.load %arg6[%c0_15, %c0_16] : memref<8x128xf32, #tpu.memory_space<vmem>>, vector<8x128xf32>
      tpu.vector_store %arg6[%c0_15, %c0_16], %17 {strides = array<i32>} : memref<8x128xf32, #tpu.memory_space<vmem>>, vector<8x128xf32>,
    } else {
    }
    return
  }
  func.func @transform_0(%arg0: i32, %arg1: i32, %arg2: i32) -> (i32, i32) {
    %c0_i32 = arith.constant 0 : i32
    return %arg0, %arg2 : i32, i32
  }
  func.func @transform_1(%arg0: i32, %arg1: i32, %arg2: i32) -> (i32, i32) {
    %c0_i32 = arith.constant 0 : i32
    return %arg2, %arg1 : i32, i32
  }
  func.func @transform_2(%arg0: i32, %arg1: i32, %arg2: i32) -> (i32, i32) {
    %c0_i32 = arith.constant 0 : i32
    %c0_i32_0 = arith.constant 0 : i32
    return %c0_i32, %arg1 : i32, i32
  }
  func.func @transform_3(%arg0: i32, %arg1: i32, %arg2: i32) -> (i32, i32) {
    %c0_i32 = arith.constant 0 : i32
    return %arg0, %arg1 : i32, i32
  }
}

</mosaic_0001>

<llo_original>
// kernel: tpu_custom_call.1
$region0: #{tpu_custom_call.1}
  #allocation0 [shape = 'u32[]', space=smem, size = 0x4, offset = 0x4, fixed_abs, tag = 'smem constant byte address 0x4 - core index']
  #allocation1 [shape = 'u32[72,128]{1,0:T(1,128)}', space=vmem, size = 0x9000, scoped, tag = 'internal scratch']
  #allocation2 [shape = 'f32[8,128]{1,0:T(8,128)}', space=vmem, size = 0x1000, scoped, tag = 'scratch operand']
  %s0 = inlined_call_operand.hbm [shape: bf16[8,128], index: 0, kind: input, shape index: {}]
  %s1 = inlined_call_operand.hbm [shape: bf16[128,128], index: 1, kind: input, shape index: {}]
  %s2 = inlined_call_operand.vmem [shape: f32[1,128], index: 2, kind: input, shape index: {}]
  %s3 = inlined_call_operand.hbm [shape: f32[8,128], index: 3, kind: output, shape index: {}]
  %s4 = sld [smem:[#allocation0]]
  $region38: #{tpu_custom_call.1} parent=0
    _
  %s6 = ssub.s32 1, %s4
  %s7 = scalar_select 0, %s6, %s4
  $region1: #{tpu_custom_call.1} parent=0
    #allocation3 [shape = 'u8[2048]{0}', space=vmem, size = 0x800, scoped, tag = 'input window, operand 0, single buffered']
    #allocation4 [shape = 's32[1]{0}', space=sflag, size = 0x4, scoped, tag = 'scoped memory for tpu_custom_call.1']
    #allocation5 [shape = 's32[1]{0}', space=sflag, size = 0x4, scoped, tag = 'scoped memory for tpu_custom_call.1']
    #allocation6 [shape = 'u8[32768]{0}', space=vmem, size = 0x8000, scoped, tag = 'input window, operand 1, single buffered']
    #allocation7 [shape = 's32[1]{0}', space=sflag, size = 0x4, scoped, tag = 'scoped memory for tpu_custom_call.1']
    #allocation8 [shape = 'u8[4096]{0}', space=vmem, size = 0x1000, scoped, tag = 'output window, operand 0, single buffered']
    %8 = vsyncpa [#allocation4], 0
    %9 = vsyncpa [#allocation7], 0
    %10 = vsyncpa [#allocation5], 0
    // Predicated region
    $region2: #{tpu_custom_call.1} parent=1 // pred_check
      _
    $region3: #{tpu_custom_call.1} parent=1 // pred_check_branch
      %12 = sbr.rel (0) target = $region5
    $region4: #{tpu_custom_call.1} parent=1 // pred_region
      %14 = vsyncadd [#allocation4], 0
      %s16 = sshll.u32 %s0, 4
      %s17 = int_to_ptr.hbm [resolvable:$true] %s16
      %s18 = sshll.u32 [#allocation3], 4
      %s19 = int_to_ptr.vmem [resolvable:$true] %s18
      %21 = dma.hbm_to_vmem [thread:$0]  %s17, 64, %s19, [#allocation4]
    $region5: #{tpu_custom_call.1} parent=1 // pred_fallthru
      _
    // Predicated region
    $region6: #{tpu_custom_call.1} parent=1 // pred_check
      _
    $region7: #{tpu_custom_call.1} parent=1 // pred_check_branch
      %23 = sbr.rel (0) target = $region9
    $region8: #{tpu_custom_call.1} parent=1 // pred_region
      %25 = vsyncadd [#allocation7], 0
      %s26 = sshll.u32 %s1, 4
      %s27 = int_to_ptr.hbm [resolvable:$true] %s26
      %s28 = sshll.u32 [#allocation6], 4
      %s29 = int_to_ptr.vmem [resolvable:$true] %s28
      %34 = dma.hbm_to_vmem [thread:$0]  %s27, 1024, %s29, [#allocation7], 64, 64, 4
    $region9: #{tpu_custom_call.1} parent=1 // pred_fallthru
      _
    // Predicated region
    $region10: #{tpu_custom_call.1} parent=1 // pred_check
      _
    $region11: #{tpu_custom_call.1} parent=1 // pred_check_branch
      %36 = sbr.rel (0) target = $region13
    $region12: #{tpu_custom_call.1} parent=1 // pred_region
      _
    $region13: #{tpu_custom_call.1} parent=1 // pred_fallthru
      _
    // Predicated region
    $region14: #{tpu_custom_call.1} parent=1 // pred_check
      _
    $region15: #{tpu_custom_call.1} parent=1 // pred_check_branch
      %38 = sbr.rel (0) target = $region17
    $region16: #{tpu_custom_call.1} parent=1 // pred_region
      %40 = dma.done [#allocation4], 64
    $region17: #{tpu_custom_call.1} parent=1 // pred_fallthru
      _
    // Predicated region
    $region18: #{tpu_custom_call.1} parent=1 // pred_check
      _
    $region19: #{tpu_custom_call.1} parent=1 // pred_check_branch
      %42 = sbr.rel (0) target = $region21
    $region20: #{tpu_custom_call.1} parent=1 // pred_region
      %44 = dma.done [#allocation7], 1024
    $region21: #{tpu_custom_call.1} parent=1 // pred_fallthru
      _
    %p45 = scmp.eq.s32.totalorder 0, 0
    // Predicated region
    $region22: #{tpu_custom_call.1} parent=1 // pred_check
      %p46 = pneg %p45
    $region23: #{tpu_custom_call.1} parent=1 // pred_check_branch
      %48 = sbr.rel (%p46) target = $region25
    $region24: #{tpu_custom_call.1} parent=1 // pred_region
      %49 = vst [vmem:[#allocation2] sm:$0xff] 0.0
    $region25: #{tpu_custom_call.1} parent=1 // pred_fallthru
      _
    %v50 = vld [vmem:[#allocation2] sm:$0xff]
    %v51 = vld [vmem:[#allocation3] sm:$0xf]
    %v52 = vld [vmem:[#allocation6] sm:$0xf]
    %v53 = vld [vmem:[#allocation6 + $0x4] sm:$0xf]
    %v54 = vld [vmem:[#allocation6 + $0x8] sm:$0xf]
    %v55 = vld [vmem:[#allocation6 + $0xc] sm:$0xf]
    %v56 = vld [vmem:[#allocation6 + $0x10] sm:$0xf]
    %v57 = vld [vmem:[#allocation6 + $0x14] sm:$0xf]
    %v58 = vld [vmem:[#allocation6 + $0x18] sm:$0xf]
    %v59 = vld [vmem:[#allocation6 + $0x1c] sm:$0xf]
    %v60 = vld [vmem:[#allocation6 + $0x20] sm:$0xf]
    %v61 = vld [vmem:[#allocation6 + $0x24] sm:$0xf]
    %v62 = vld [vmem:[#allocation6 + $0x28] sm:$0xf]
    %v63 = vld [vmem:[#allocation6 + $0x2c] sm:$0xf]
    %v64 = vld [vmem:[#allocation6 + $0x30] sm:$0xf]
    %v65 = vld [vmem:[#allocation6 + $0x34] sm:$0xf]
    %v66 = vld [vmem:[#allocation6 + $0x38] sm:$0xf]
    %v67 = vld [vmem:[#allocation6 + $0x3c] sm:$0xf]
    %v84 = vunpack.c.l.b16 %v52
    %v85 = vunpack.c.l.b16 %v53
    %v86 = vunpack.c.l.b16 %v54
    %v87 = vunpack.c.l.b16 %v55
    %v88 = vunpack.c.l.b16 %v56
    %v89 = vunpack.c.l.b16 %v57
    %v90 = vunpack.c.l.b16 %v58
    %v91 = vunpack.c.l.b16 %v59
    %v92 = vunpack.c.l.b16 %v60
    %v93 = vunpack.c.l.b16 %v61
    %v94 = vunpack.c.l.b16 %v62
    %v95 = vunpack.c.l.b16 %v63
    %v96 = vunpack.c.l.b16 %v64
    %v97 = vunpack.c.l.b16 %v65
    %v98 = vunpack.c.l.b16 %v66
    %v99 = vunpack.c.l.b16 %v67
    %v100 = vpack.c.b16 %v85, %v84
    %v101 = vpack.c.b16 %v87, %v86
    %v102 = vpack.c.b16 %v89, %v88
    %v103 = vpack.c.b16 %v91, %v90
    %v104 = vpack.c.b16 %v93, %v92
    %v105 = vpack.c.b16 %v95, %v94
    %v106 = vpack.c.b16 %v97, %v96
    %v107 = vpack.c.b16 %v99, %v98
    %116 = vmatpush.bf16.msra.mxu0 %v107
    %117 = vmatpush.bf16.msra.mxu0 %v106
    %118 = vmatpush.bf16.msra.mxu0 %v105
    %119 = vmatpush.bf16.msra.mxu0 %v104
    %120 = vmatpush.bf16.msra.mxu0 %v103
    %121 = vmatpush.bf16.msra.mxu0 %v102
    %122 = vmatpush.bf16.msra.mxu0 %v101
    %123 = vmatpush.bf16.msra.mxu0 %v100
    %124 = vmatmul.bf16.gmra.mxu0 %v51
    %v125 = vpop.f32.mrf.mxu0
    %v126 = vadd.f32 0.0, %v125
    %v127 = vpop.f32.mrf.mxu0
    %128 = vdwg.mxu0
    %v129 = vadd.f32 %v50, %v126
    %130 = vst [vmem:[#allocation2] sm:$0xff] %v129
    // Predicated region
    $region26: #{tpu_custom_call.1} parent=1 // pred_check
      %p131 = pneg %p45
    $region27: #{tpu_custom_call.1} parent=1 // pred_check_branch
      %133 = sbr.rel (%p131) target = $region29
    $region28: #{tpu_custom_call.1} parent=1 // pred_region
      %v134 = vld [vmem:[#allocation2] sm:$0xff]
      %v135 = vmul.f32 %v134, 0.25
      %v136 = vld [vmem:[%s2] sm:$0x1]
      %v138 = vperm.slane %v136, 0
      %v140 = vadd.f32 %v135, %v138
      %141 = vst [vmem:[#allocation8] sm:$0xff] %v140
    $region29: #{tpu_custom_call.1} parent=1 // pred_fallthru
      _
    // Predicated region
    $region30: #{tpu_custom_call.1} parent=1 // pred_check
      _
    $region31: #{tpu_custom_call.1} parent=1 // pred_check_branch
      %143 = sbr.rel (0) target = $region33
    $region32: #{tpu_custom_call.1} parent=1 // pred_region
      %145 = vsyncadd [#allocation5], 0
      %s147 = sshll.u32 [#allocation8], 4
      %s148 = int_to_ptr.vmem [resolvable:$true] %s147
      %s149 = sshll.u32 %s3, 4
      %s150 = int_to_ptr.hbm [resolvable:$true] %s149
      %152 = dma.vmem_to_hbm [thread:$0]  %s148, 128, %s150, [#allocation5]
    $region33: #{tpu_custom_call.1} parent=1 // pred_fallthru
      _
    // Predicated region
    $region34: #{tpu_custom_call.1} parent=1 // pred_check
      _
    $region35: #{tpu_custom_call.1} parent=1 // pred_check_branch
      %154 = sbr.rel (0) target = $region37
    $region36: #{tpu_custom_call.1} parent=1 // pred_region
      %156 = dma.done [#allocation5], 128
    $region37: #{tpu_custom_call.1} parent=1 // pred_fallthru
      _
    %157 = vsyncpa [#allocation4], 1
    %158 = vsyncpa [#allocation7], 1
    %159 = vsyncpa [#allocation5], 1

</llo_original>
